<compile_context>
chip_gen: v6e
topology: v6e:2x2x1
jax: 0.10.0
libtpu: 0.0.40
codegen_flags: <defaults>
</compile_context>

<pallas_src>
import functools

import jax
import jax.numpy as jnp
from jax import lax
from jax.experimental import pallas as pl
from jax.experimental.pallas import tpu as pltpu

_SQRT_HALF = 0.7071067811865476   # sqrt(0.5)
_TWO_PI = 6.283185307179586
_MAX_TILE = 65536                 # lanes per grid step (multiple of 128), ~256 KiB-1 MiB/buffer


def _bits_to_f12(bits):
    """uint32 random bits -> float32 uniform in [1, 2)."""
    mant = (bits >> jnp.uint32(9)) | jnp.uint32(0x3F800000)
    return lax.bitcast_convert_type(mant, jnp.float32)


def _awgn_kernel(bits_ref, out_ref, *, lo, hi):
    # bits_ref: (1, T) uint32 ; out_ref: (1, T) dtype -> uniform SNR in [lo, hi)
    f = _bits_to_f12(bits_ref[...])                         # [1, 2)
    scale = jnp.float32(hi - lo)
    shift = jnp.float32(lo - (hi - lo))                     # folds the (f - 1)
    out_ref[...] = (scale * f + shift).astype(out_ref.dtype)


def _rayleigh_kernel(bits_ref, out_ref, *, lo, hi):
    # bits_ref: (3, T) uint32, rows = [bm_u1, bm_u2, snr_u]
    # out_ref : (3, T) dtype,  rows = [h1, h2, snr]
    f1 = _bits_to_f12(bits_ref[0:1, :])                     # [1, 2)
    f2 = _bits_to_f12(bits_ref[1:2, :])
    f3 = _bits_to_f12(bits_ref[2:3, :])

    # Box-Muller: u1 = f1 - 1 in [0,1)  =>  1 - u1 = 2 - f1 in (0,1]  (safe log)
    r = jnp.sqrt(jnp.float32(-2.0) * jnp.log(jnp.float32(2.0) - f1))
    theta = jnp.float32(_TWO_PI) * (f2 - jnp.float32(1.0))
    amp = jnp.float32(_SQRT_HALF) * r
    out_ref[0:1, :] = (amp * jnp.cos(theta)).astype(out_ref.dtype)
    out_ref[1:2, :] = (amp * jnp.sin(theta)).astype(out_ref.dtype)

    # uniform SNR in [lo, hi), fused FMA
    scale = jnp.float32(hi - lo)
    shift = jnp.float32(lo - (hi - lo))
    out_ref[2:3, :] = (scale * f3 + shift).astype(out_ref.dtype)


class UniformCSIGenerator:
    """JAX/Pallas port of the PyTorch UniformCSIGenerator module."""

    def __init__(self, channel, train_min, train_max, val_min, val_max,
                 test_min, test_max, **kwargs):
        self.channel = channel
        self.test_min = test_min
        self.test_max = test_max
        self.ranges = {
            "train": (train_min, train_max),
            "val": (val_min, val_max),
            "test": (test_min, test_max),
        }

    def __call__(self, num_data, dtype, key, stage):
        lo, hi = self.ranges[stage]
        lo = float(lo)
        hi = float(hi)

        if self.channel == "awgn":
            kernel = functools.partial(_awgn_kernel, lo=lo, hi=hi)
            bits_rows, out_rows = 1, 1
        elif self.channel == "rayleigh":
            kernel = functools.partial(_rayleigh_kernel, lo=lo, hi=hi)
            bits_rows, out_rows = 3, 3
        else:
            raise NotImplementedError

        # pad N to a multiple of 128, tile it (TILE multiple of 128, capped)
        n128 = -(-num_data // 128) * 128
        tile = min(_MAX_TILE, n128)
        n_pad = -(-n128 // tile) * tile
        grid = (n_pad // tile,)

        # raw random bits (device-side threefry); distinct per tile by construction
        bits = jax.random.bits(key, (bits_rows, n_pad), dtype=jnp.uint32)

        out = pl.pallas_call(
            kernel,
            out_shape=jax.ShapeDtypeStruct((out_rows, n_pad), dtype),
            grid=grid,
            in_specs=[pl.BlockSpec((bits_rows, tile), lambda i: (0, i))],
            out_specs=pl.BlockSpec((out_rows, tile), lambda i: (0, i)),
            compiler_params=pltpu.CompilerParams(
                dimension_semantics=("parallel",)),
        )(bits)

        # lane-dense (C, N_pad) -> (num_data, C) as in the PyTorch module
        return out.T[:num_data]


if __name__ == "__main__":
    key = jax.random.PRNGKey(0)
    key_awgn, key_ray = jax.random.split(key)

    num_data = 16
    dtype = jnp.float32

    gen_awgn = UniformCSIGenerator(
        channel="awgn",
        train_min=0.0, train_max=20.0,
        val_min=0.0, val_max=20.0,
        test_min=5.0, test_max=15.0,
    )
    gen_ray = UniformCSIGenerator(
        channel="rayleigh",
        train_min=0.0, train_max=20.0,
        val_min=0.0, val_max=20.0,
        test_min=5.0, test_max=15.0,
    )

    csi_awgn = gen_awgn(num_data, dtype, key_awgn, "train")
    csi_ray = gen_ray(num_data, dtype, key_ray, "test")
    jax.block_until_ready((csi_awgn, csi_ray))

    # sanity checks on shapes / dtypes / ranges
    assert csi_awgn.shape == (num_data, 1) and csi_awgn.dtype == dtype
    assert csi_ray.shape == (num_data, 3) and csi_ray.dtype == dtype
    assert bool(jnp.all(jnp.isfinite(csi_awgn))) and bool(jnp.all(jnp.isfinite(csi_ray)))
    assert bool(jnp.all(csi_awgn >= 0.0)) and bool(jnp.all(csi_awgn < 20.0))
    assert bool(jnp.all(csi_ray[:, 2] >= 5.0)) and bool(jnp.all(csi_ray[:, 2] < 15.0))

    print("KERNEL_OK")
</pallas_src>

<mosaic_0001>
module attributes {stable_mosaic.version = 11 : i64} {
  func.func @_awgn_kernel(%arg0: i32, %arg1: memref<1x128xi32, #tpu.memory_space<vmem>>, %arg2: memref<1x128xf32, #tpu.memory_space<vmem>>) attributes {dimension_semantics = [#tpu.dimension_semantics<parallel>], iteration_bounds = array<i64: 1>, scalar_prefetch = 0 : i64, scratch_operands = 0 : i64, tpu.core_type = #tpu.core_type<tc>, window_params = [{transform_indices = @transform_0, window_bounds = array<i64: 1, 128>}, {transform_indices = @transform_1, window_bounds = array<i64: 1, 128>}]} {
    %c0 = arith.constant 0 : index
    %c0_0 = arith.constant 0 : index
    %0 = vector.load %arg1[%c0, %c0_0] : memref<1x128xi32, #tpu.memory_space<vmem>>, vector<1x128xi32>
    %c9_i32 = arith.constant 9 : i32
    %1 = vector.broadcast %c9_i32 : i32 to vector<1x128xi32>
    %2 = arith.shrui %0, %1 : vector<1x128xi32>
    %c1065353216_i32 = arith.constant 1065353216 : i32
    %3 = vector.broadcast %c1065353216_i32 : i32 to vector<1x128xi32>
    %4 = arith.ori %2, %3 : vector<1x128xi32>
    %5 = tpu.bitcast %4 : vector<1x128xi32> -> vector<1x128xf32>
    %cst = arith.constant 2.000000e+01 : f32
    %6 = vector.broadcast %cst : f32 to vector<1x128xf32>
    %7 = arith.mulf %6, %5 : vector<1x128xf32>
    %cst_1 = arith.constant -2.000000e+01 : f32
    %8 = vector.broadcast %cst_1 : f32 to vector<1x128xf32>
    %9 = arith.addf %7, %8 : vector<1x128xf32>
    %c0_2 = arith.constant 0 : index
    %c0_3 = arith.constant 0 : index
    %10 = vector.load %arg2[%c0_2, %c0_3] : memref<1x128xf32, #tpu.memory_space<vmem>>, vector<1x128xf32>
    tpu.vector_store %arg2[%c0_2, %c0_3], %9 {strides = array<i32>} : memref<1x128xf32, #tpu.memory_space<vmem>>, vector<1x128xf32>,
    return
  }
  func.func @transform_0(%arg0: i32) -> (i32, i32) {
    %c0_i32 = arith.constant 0 : i32
    %c0_i32_0 = arith.constant 0 : i32
    return %c0_i32, %arg0 : i32, i32
  }
  func.func @transform_1(%arg0: i32) -> (i32, i32) {
    %c0_i32 = arith.constant 0 : i32
    %c0_i32_0 = arith.constant 0 : i32
    return %c0_i32, %arg0 : i32, i32
  }
}

</mosaic_0001>

<llo_original>
// kernel: tpu_custom_call.1
$region0: #{tpu_custom_call.1}
  #allocation0 [shape = 'u32[]', space=smem, size = 0x4, offset = 0x4, fixed_abs, tag = 'smem constant byte address 0x4 - core index']
  #allocation1 [shape = 'u32[144,128]{1,0:T(1,128)}', space=vmem, size = 0x12000, scoped, tag = 'internal scratch']
  %s0 = inlined_call_operand.hbm [shape: u32[1,128], index: 0, kind: input, shape index: {}]
  %s1 = inlined_call_operand.hbm [shape: f32[1,128], index: 1, kind: output, shape index: {}]
  %s2 = sld [smem:[#allocation0]]
  $region18: #{tpu_custom_call.1} parent=0
    _
  %s4 = ssub.s32 1, %s2
  %s5 = scalar_select 0, %s4, %s2
  $region1: #{tpu_custom_call.1} parent=0
    #allocation2 [shape = 'u8[512]{0}', space=vmem, size = 0x400, scoped, tag = 'input window, operand 0, single buffered']
    #allocation3 [shape = 's32[1]{0}', space=sflag, size = 0x4, scoped, tag = 'scoped memory for tpu_custom_call.1']
    #allocation4 [shape = 's32[1]{0}', space=sflag, size = 0x4, scoped, tag = 'scoped memory for tpu_custom_call.1']
    #allocation5 [shape = 'u8[512]{0}', space=vmem, size = 0x400, scoped, tag = 'output window, operand 0, single buffered']
    %6 = vsyncpa [#allocation3], 0
    %7 = vsyncpa [#allocation4], 0
    // Predicated region
    $region2: #{tpu_custom_call.1} parent=1 // pred_check
      _
    $region3: #{tpu_custom_call.1} parent=1 // pred_check_branch
      %9 = sbr.rel (0) target = $region5
    $region4: #{tpu_custom_call.1} parent=1 // pred_region
      %s11 = ssub.s32 16, 16
      %12 = vsyncadd [#allocation3], %s11
      %s14 = sshll.u32 [#allocation2], 4
      %s15 = int_to_ptr.vmem [resolvable:$true] %s14
      %17 = dma.hbm_to_vmem [thread:$0]  %s0, 16, %s15, [#allocation3]
    $region5: #{tpu_custom_call.1} parent=1 // pred_fallthru
      _
    // Predicated region
    $region6: #{tpu_custom_call.1} parent=1 // pred_check
      _
    $region7: #{tpu_custom_call.1} parent=1 // pred_check_branch
      %19 = sbr.rel (0) target = $region9
    $region8: #{tpu_custom_call.1} parent=1 // pred_region
      %20 = dma.done [#allocation3], 16
    $region9: #{tpu_custom_call.1} parent=1 // pred_fallthru
      _
    %v21 = vld [vmem:[#allocation2] sm:$0x1]
    %v22 = vshrl.u32 %v21, 9
    %v23 = vor.u32 %v22, 1065353216
    %v25 = vmul.f32 %v23, 20.0
    %v26 = vadd.f32 %v25, -20.0
    %27 = vst [vmem:[#allocation5] sm:$0x1] %v26
    // Predicated region
    $region10: #{tpu_custom_call.1} parent=1 // pred_check
      _
    $region11: #{tpu_custom_call.1} parent=1 // pred_check_branch
      %29 = sbr.rel (0) target = $region13
    $region12: #{tpu_custom_call.1} parent=1 // pred_region
      %s31 = ssub.s32 16, 16
      %32 = vsyncadd [#allocation4], %s31
      %s34 = sshll.u32 [#allocation5], 4
      %s35 = int_to_ptr.vmem [resolvable:$true] %s34
      %37 = dma.vmem_to_hbm [thread:$0]  %s35, 16, %s1, [#allocation4]
    $region13: #{tpu_custom_call.1} parent=1 // pred_fallthru
      _
    // Predicated region
    $region14: #{tpu_custom_call.1} parent=1 // pred_check
      _
    $region15: #{tpu_custom_call.1} parent=1 // pred_check_branch
      %39 = sbr.rel (0) target = $region17
    $region16: #{tpu_custom_call.1} parent=1 // pred_region
      %40 = dma.done [#allocation4], 16
    $region17: #{tpu_custom_call.1} parent=1 // pred_fallthru
      _
    %41 = vsyncpa [#allocation3], 1
    %42 = vsyncpa [#allocation4], 1

</llo_original>
